<compile_context>
chip_gen: v7x
topology: tpu7x:2x2x1
jax: 0.10.0
libtpu: 0.0.40
codegen_flags: <defaults>
</compile_context>

<pallas_src>
import functools

import numpy as np
import jax
import jax.numpy as jnp
from jax.experimental import pallas as pl
from jax.experimental.pallas import tpu as pltpu


# ----------------------------------------------------------------------------
# Deterministic weight init: replicate scipy.ndimage.gaussian_filter applied to
# a (K, K) delta image, mode='reflect', truncate=4.0.  That table is exactly
# outer(v, v) where v is the same filter applied to a 1-D delta -> exactly separable.
# ----------------------------------------------------------------------------
def _gaussian_kernel1d(sigma, radius):
    x = np.arange(-radius, radius + 1, dtype=np.float64)
    phi = np.exp(-0.5 * (x / sigma) ** 2)
    return phi / phi.sum()


def _reflect_idx(i, n):
    # scipy 'reflect' mode: (d c b a | a b c d | d c b a)
    p = 2 * n
    i = np.mod(i, p)
    return np.where(i >= n, p - 1 - i, i)


def _correlate1d_reflect(a, w, axis):
    radius = (len(w) - 1) // 2
    a = np.moveaxis(a, axis, 0)
    n = a.shape[0]
    out = np.zeros_like(a)
    for k in range(len(w)):
        idx = _reflect_idx(np.arange(n) + k - radius, n)
        out += w[k] * a[idx]
    return np.moveaxis(out, 0, axis)


def make_gaussian_weights(kernel_size, std):
    """Returns (v, k2d): 1-D separable taps (K,) and the full (K, K) table."""
    delta = np.zeros((kernel_size,), np.float64)
    delta[kernel_size // 2] = 1.0
    radius = int(4.0 * std + 0.5)
    w1d = _gaussian_kernel1d(std, radius)
    v = _correlate1d_reflect(delta, w1d, axis=0)      # (K,)
    k2d = np.outer(v, v)                               # == gaussian_filter(delta2d)
    return v.astype(np.float32), k2d.astype(np.float32)


# ----------------------------------------------------------------------------
# Pallas kernel: separable depthwise conv on one (chan_tile, row_tile, W) block.
# ----------------------------------------------------------------------------
def _blur_kernel(*refs, wv, has_halo):
    # refs (has_halo=True):  mwh_ref, x_ref, halo_ref, o_ref, xs_ref
    # refs (has_halo=False): mwh_ref, x_ref,           o_ref, xs_ref
    #   mwh_ref : (K, W)  f32 VMEM   masked horizontal weights (0 outside the image)
    #   x_ref   : (ct, th, W)        input row tile (input dtype)
    #   halo_ref: (ct, 1, 2P, W)     P rows above + P rows below (zero at border)
    #   o_ref   : (ct, th, W)        output tile (input dtype)
    #   xs_ref  : (ct, th + 2P, W)   f32 scratch: vertically-extended tile
    if has_halo:
        mwh_ref, x_ref, halo_ref, o_ref, xs_ref = refs
    else:
        mwh_ref, x_ref, o_ref, xs_ref = refs
        halo_ref = None

    ct, th, W = o_ref.shape
    K = len(wv)
    P = K // 2

    # ---- assemble the vertically extended tile (rows [-P, th+P)), f32 accumulate ----
    xs_ref[:, P:P + th, :] = x_ref[...].astype(jnp.float32)
    if has_halo:
        halo = halo_ref[...].astype(jnp.float32)        # (ct, 1, 2P, W)
        xs_ref[:, :P, :] = halo[:, 0, :P, :]
        xs_ref[:, P + th:, :] = halo[:, 0, P:, :]
    else:                                               # single row tile: zero padding
        zeros = jnp.zeros((ct, P, W), jnp.float32)
        xs_ref[:, :P, :] = zeros
        xs_ref[:, P + th:, :] = zeros

    # ---- vertical 1-D pass: sublane-offset loads, taps baked as Python constants ----
    v = float(wv[0]) * xs_ref[:, 0:th, :]
    for t in range(1, K):                               # K is small & static -> unrolled
        v = v + float(wv[t]) * xs_ref[:, t:t + th, :]

    # ---- horizontal 1-D pass: XLU lane-rolls * masked-weight rows (no iota/select) --
    acc = v * mwh_ref[P].reshape(1, 1, W)               # center tap, no shift
    for t in range(K):
        if t == P:
            continue
        rolled = pltpu.roll(v, shift=(P - t) % W, axis=2)
        acc = acc + rolled * mwh_ref[t].reshape(1, 1, W)

    o_ref[...] = acc.astype(o_ref.dtype)


# ----------------------------------------------------------------------------
# Tiling helpers (VMEM-/generation-aware) + halo construction
# ----------------------------------------------------------------------------
def _vmem_limit_bytes():
    phys = 64 * 1024 * 1024                             # conservative default (v7x)
    try:
        info = pltpu.get_tpu_info()
        phys = int(getattr(info, "vmem_capacity_bytes", phys)) or phys
    except Exception:
        pass
    return min(int(phys * 0.7), 100 * 1024 * 1024)


def _footprint_bytes(ct, th, W, P, K, esize):
    # double-buffered inputs/outputs + single-buffered f32 scratch
    x_blk = ct * th * W * esize
    halo_blk = ct * 2 * P * W * esize
    mwh_blk = K * W * 4
    out_blk = ct * th * W * esize
    scratch = ct * (th + 2 * P) * W * 4
    return 2 * (x_blk + halo_blk + mwh_blk + out_blk) + scratch


def _row_tile_candidates(H):
    if H < 8 or H % 8 != 0:
        return [H]                                      # full-extent block is always legal
    return [d for d in range(8, H + 1, 8) if H % d == 0]


def _pick_tiles(B, H, W, P, K, esize, row_tile, chan_tile, limit):
    budget = max(limit - 4 * 1024 * 1024, 8 * 1024 * 1024)
    target = min(16 * 1024 * 1024, budget)

    if row_tile is not None:
        assert H % row_tile == 0, "row_tile must divide H"
        assert row_tile == H or row_tile % 8 == 0, "row_tile must be a multiple of 8"
        ths = [row_tile]
    else:
        ths = _row_tile_candidates(H)

    fits_target = [c for c in ths if _footprint_bytes(1, c, W, P, K, esize) <= target]
    if fits_target:
        th = max(fits_target)
    else:
        fits_budget = [c for c in ths if _footprint_bytes(1, c, W, P, K, esize) <= budget]
        # TODO(synk): if even the smallest row tile does not fit, W tiling is needed.
        th = min(fits_budget) if fits_budget else min(ths)

    if chan_tile is not None:
        assert B % chan_tile == 0, "chan_tile must divide the flattened N*C dim"
        ct = chan_tile
    else:
        n_h = H // th
        cands = [d for d in range(1, B + 1)
                 if B % d == 0 and _footprint_bytes(d, th, W, P, K, esize) <= target]
        if not cands:
            cands = [1]

        def score(d):
            total = (B // d) * n_h
            # prefer >=2 grid steps with an even total (v7x: 2 TensorCores), then big tiles
            return (total >= 2, total % 2 == 0, d)

        ct = max(cands, key=score)

    # if the whole problem collapsed to a single grid step, split rows so both
    # TensorCores on v7x get work (harmless extra step on 1-TC chips).
    if row_tile is None and (B // ct) * (H // th) == 1:
        smaller = [c for c in ths if c < th]
        if smaller:
            th = max(smaller)
    return th, ct


def _build_halo(x, th, P):
    """(B, n_h, 2P, W): for each row tile, the P rows above and P rows below, zero
    at the image border.  Built from strided slices of x (no full-image shifted
    copies) -> ~2P/th of the image in extra HBM traffic."""
    B, H, W = x.shape
    n_h = H // th
    xr = x.reshape(B, n_h, th, W)
    zeros = jnp.zeros((B, 1, P, W), x.dtype)
    tops = jnp.concatenate([zeros, xr[:, :-1, th - P:, :]], axis=1)   # rows i*th-P .. i*th-1
    bots = jnp.concatenate([xr[:, 1:, :P, :], zeros], axis=1)         # rows (i+1)*th .. +P-1
    return jnp.concatenate([tops, bots], axis=2)                      # (B, n_h, 2P, W)


# ----------------------------------------------------------------------------
# Wrapper
# ----------------------------------------------------------------------------
def _blur_2d(x, wv, row_tile, chan_tile):
    B, H, W = x.shape
    K = len(wv)
    assert K % 2 == 1, "kernel_size must be odd"
    P = K // 2
    if P == 0:                                          # K == 1: plain per-pixel scale
        return x * (wv[0] * wv[0])

    esize = jnp.dtype(x.dtype).itemsize

    # pad W to a lane-dense multiple of 128 (zero pad is exactly conv's zero padding;
    # padded output columns are sliced off afterwards).
    W_pad = ((W + 127) // 128) * 128
    if W_pad != W:
        x = jnp.pad(x, ((0, 0), (0, 0), (0, W_pad - W)))

    limit = _vmem_limit_bytes()
    th, ct = _pick_tiles(B, H, W_pad, P, K, esize, row_tile, chan_tile, limit)
    n_h = H // th
    n_b = B // ct
    has_halo = n_h > 1
    if has_halo:
        assert th >= P, "row tile must be at least kernel_size // 2 rows"

    # masked horizontal weights (built at trace time from static shapes): weight is 0
    # wherever the tap would read a column outside [0, W_pad).
    taps = np.asarray(wv, np.float32)                              # (K,)
    src = np.arange(W_pad)[None, :] + (np.arange(K)[:, None] - P)  # (K, W_pad)
    mwh = jnp.asarray(np.where((src >= 0) & (src < W_pad),
                               taps[:, None], np.float32(0.0)).astype(np.float32))

    kernel = functools.partial(_blur_kernel, wv=wv, has_halo=has_halo)

    in_specs = [
        pl.BlockSpec((K, W_pad), lambda b, i: (0, 0)),                   # masked weights
        pl.BlockSpec((ct, th, W_pad), lambda b, i: (b, i, 0)),           # x tile
    ]
    inputs = [mwh, x]
    halo_bytes = 0
    if has_halo:
        halo = _build_halo(x, th, P)                                     # (B, n_h, 2P, W)
        in_specs.append(pl.BlockSpec((ct, 1, 2 * P, W_pad), lambda b, i: (b, i, 0, 0)))
        inputs.append(halo)
        halo_bytes = B * n_h * 2 * P * W_pad * esize

    out = pl.pallas_call(
        kernel,
        out_shape=jax.ShapeDtypeStruct((B, H, W_pad), x.dtype),
        grid_spec=pltpu.PrefetchScalarGridSpec(
            num_scalar_prefetch=0,
            grid=(n_b, n_h),
            in_specs=in_specs,
            out_specs=pl.BlockSpec((ct, th, W_pad), lambda b, i: (b, i, 0)),
            scratch_shapes=[pltpu.VMEM((ct, th + 2 * P, W_pad), jnp.float32)],
        ),
        compiler_params=pltpu.CompilerParams(
            dimension_semantics=("parallel", "parallel"),
            vmem_limit_bytes=limit,
        ),
        cost_estimate=pl.CostEstimate(
            flops=4 * K * B * H * W_pad,                # separable: 2 passes x K taps x MAC
            transcendentals=0,
            bytes_accessed=2 * B * H * W_pad * esize + halo_bytes + K * W_pad * 4,
        ),
    )(*inputs)

    if W_pad != W:
        out = out[..., :W]
    return out


class GaussianBlur:
    """Pallas TPU equivalent of the PyTorch GaussianBlur module."""

    def __init__(self, num_channels, kernel_size, std):
        self.num_channels = int(num_channels)
        self.kernel_size = int(kernel_size)
        v1d, k2d = make_gaussian_weights(self.kernel_size, std)
        self.k2d = k2d                                   # full (K, K) table (for reference)
        wv = tuple(float(t) for t in v1d)                # taps baked as Python constants

        def fwd(x, unsqueeze=True, row_tile=None, chan_tile=None):
            if unsqueeze:
                out = _blur_2d(x, wv, row_tile, chan_tile)        # x: (C, H, W)
                return jnp.squeeze(out)                           # matches torch .squeeze()
            N, C, H, W = x.shape
            out = _blur_2d(x.reshape(N * C, H, W), wv, row_tile, chan_tile)
            return out.reshape(N, C, H, W)

        self._fwd = jax.jit(fwd, static_argnames=("unsqueeze", "row_tile", "chan_tile"))

    def __call__(self, x, unsqueeze=True, row_tile=None, chan_tile=None):
        if unsqueeze:
            assert x.ndim == 3 and x.shape[0] == self.num_channels
        else:
            assert x.ndim == 4 and x.shape[1] == self.num_channels
        return self._fwd(x, unsqueeze=unsqueeze, row_tile=row_tile, chan_tile=chan_tile)


# ----------------------------------------------------------------------------
if __name__ == "__main__":
    num_channels = 4
    kernel_size = 5
    std = 1.0
    N, H, W = 2, 16, 16

    blur = GaussianBlur(num_channels, kernel_size, std)

    key = jax.random.PRNGKey(0)
    x4 = jax.random.normal(key, (N, num_channels, H, W), dtype=jnp.float32)

    # reference: XLA grouped conv with the full 2-D table (nn.Conv2d semantics)
    w_conv = jnp.broadcast_to(jnp.asarray(blur.k2d),
                              (num_channels, 1, kernel_size, kernel_size))

    def ref(xn):
        return jax.lax.conv_general_dilated(
            xn, w_conv, window_strides=(1, 1),
            padding=[(kernel_size // 2, kernel_size // 2)] * 2,
            feature_group_count=num_channels,
            dimension_numbers=("NCHW", "OIHW", "NCHW"))

    # 1) batched path (unsqueeze=False), explicit tiles -> exercises the halo variant
    y4 = jax.block_until_ready(blur(x4, unsqueeze=False, row_tile=8, chan_tile=4))
    assert y4.shape == (N, num_channels, H, W)
    np.testing.assert_allclose(np.asarray(y4), np.asarray(ref(x4)),
                               rtol=1e-4, atol=1e-5)

    # 2) single-image path (unsqueeze=True), automatic tiles -> no-halo variant
    x3 = x4[0]
    y3 = jax.block_until_ready(blur(x3, unsqueeze=True))
    assert y3.shape == (num_channels, H, W)
    np.testing.assert_allclose(np.asarray(y3), np.asarray(ref(x3[None])[0]),
                               rtol=1e-4, atol=1e-5)

    # 3) bf16 input/output with f32 in-kernel accumulation (halo variant)
    x4b = x4.astype(jnp.bfloat16)
    y4b = jax.block_until_ready(blur(x4b, unsqueeze=False, row_tile=8))
    assert y4b.dtype == jnp.bfloat16 and y4b.shape == (N, num_channels, H, W)
    np.testing.assert_allclose(np.asarray(y4b.astype(jnp.float32)),
                               np.asarray(ref(x4b.astype(jnp.float32))),
                               rtol=5e-2, atol=5e-2)

    print("KERNEL_OK")
</pallas_src>

<mosaic_0001>
module attributes {stable_mosaic.version = 11 : i64} {
  func.func @_blur_kernel(%arg0: i32, %arg1: i32, %arg2: memref<5x128xf32, #tpu.memory_space<vmem>>, %arg3: memref<4x8x128xf32, #tpu.memory_space<vmem>>, %arg4: memref<4x1x4x128xf32, #tpu.memory_space<vmem>>, %arg5: memref<4x8x128xf32, #tpu.memory_space<vmem>>, %arg6: memref<4x12x128xf32, #tpu.memory_space<vmem>>) attributes {dimension_semantics = [#tpu.dimension_semantics<parallel>, #tpu.dimension_semantics<parallel>], iteration_bounds = array<i64: 2, 2>, scalar_prefetch = 0 : i64, scratch_operands = 1 : i64, tpu.core_type = #tpu.core_type<tc>, window_params = [{pipeline_mode = #tpu.pipeline_mode<synchronous>, transform_indices = @transform_0, window_bounds = array<i64: 5, 128>}, {transform_indices = @transform_1, window_bounds = array<i64: 4, 8, 128>}, {transform_indices = @transform_2, window_bounds = array<i64: 4, 1, 4, 128>}, {transform_indices = @transform_3, window_bounds = array<i64: 4, 8, 128>}]} {
    %c0 = arith.constant 0 : index
    %c0_0 = arith.constant 0 : index
    %c0_1 = arith.constant 0 : index
    %0 = vector.load %arg3[%c0, %c0_0, %c0_1] : memref<4x8x128xf32, #tpu.memory_space<vmem>>, vector<4x8x128xf32>
    %c0_2 = arith.constant 0 : index
    %c2 = arith.constant 2 : index
    %c0_3 = arith.constant 0 : index
    %1 = vector.load %arg6[%c0_2, %c2, %c0_3] : memref<4x12x128xf32, #tpu.memory_space<vmem>>, vector<4x8x128xf32>
    tpu.vector_store %arg6[%c0_2, %c2, %c0_3], %0 {strides = array<i32>} : memref<4x12x128xf32, #tpu.memory_space<vmem>>, vector<4x8x128xf32>,
    %c0_4 = arith.constant 0 : index
    %c0_5 = arith.constant 0 : index
    %c0_6 = arith.constant 0 : index
    %c0_7 = arith.constant 0 : index
    %2 = vector.load %arg4[%c0_4, %c0_5, %c0_6, %c0_7] : memref<4x1x4x128xf32, #tpu.memory_space<vmem>>, vector<4x1x4x128xf32>
    %3 = vector.extract_strided_slice %2 {offsets = [0, 0, 0, 0], sizes = [4, 1, 2, 128], strides = [1, 1, 1, 1]} : vector<4x1x4x128xf32> to vector<4x1x2x128xf32>
    %4 = vector.shape_cast %3 : vector<4x1x2x128xf32> to vector<4x2x128xf32>
    %c0_8 = arith.constant 0 : index
    %c0_9 = arith.constant 0 : index
    %c0_10 = arith.constant 0 : index
    %5 = vector.load %arg6[%c0_8, %c0_9, %c0_10] : memref<4x12x128xf32, #tpu.memory_space<vmem>>, vector<4x2x128xf32>
    tpu.vector_store %arg6[%c0_8, %c0_9, %c0_10], %4 {strides = array<i32>} : memref<4x12x128xf32, #tpu.memory_space<vmem>>, vector<4x2x128xf32>,
    %6 = vector.extract_strided_slice %2 {offsets = [0, 0, 2, 0], sizes = [4, 1, 2, 128], strides = [1, 1, 1, 1]} : vector<4x1x4x128xf32> to vector<4x1x2x128xf32>
    %7 = vector.shape_cast %6 : vector<4x1x2x128xf32> to vector<4x2x128xf32>
    %c0_11 = arith.constant 0 : index
    %c10 = arith.constant 10 : index
    %c0_12 = arith.constant 0 : index
    %8 = vector.load %arg6[%c0_11, %c10, %c0_12] : memref<4x12x128xf32, #tpu.memory_space<vmem>>, vector<4x2x128xf32>
    tpu.vector_store %arg6[%c0_11, %c10, %c0_12], %7 {strides = array<i32>} : memref<4x12x128xf32, #tpu.memory_space<vmem>>, vector<4x2x128xf32>,
    %c0_13 = arith.constant 0 : index
    %c0_14 = arith.constant 0 : index
    %c0_15 = arith.constant 0 : index
    %9 = vector.load %arg6[%c0_13, %c0_14, %c0_15] : memref<4x12x128xf32, #tpu.memory_space<vmem>>, vector<4x8x128xf32>
    %cst = arith.constant 0.0584229901 : f32
    %10 = vector.broadcast %cst : f32 to vector<4x8x128xf32>
    %11 = arith.mulf %10, %9 : vector<4x8x128xf32>
    %c0_16 = arith.constant 0 : index
    %c1 = arith.constant 1 : index
    %c0_17 = arith.constant 0 : index
    %12 = vector.load %arg6[%c0_16, %c1, %c0_17] : memref<4x12x128xf32, #tpu.memory_space<vmem>>, vector<4x8x128xf32>
    %cst_18 = arith.constant 0.242105275 : f32
    %13 = vector.broadcast %cst_18 : f32 to vector<4x8x128xf32>
    %14 = arith.mulf %13, %12 : vector<4x8x128xf32>
    %15 = arith.addf %11, %14 : vector<4x8x128xf32>
    %c0_19 = arith.constant 0 : index
    %c2_20 = arith.constant 2 : index
    %c0_21 = arith.constant 0 : index
    %16 = vector.load %arg6[%c0_19, %c2_20, %c0_21] : memref<4x12x128xf32, #tpu.memory_space<vmem>>, vector<4x8x128xf32>
    %cst_22 = arith.constant 0.398943484 : f32
    %17 = vector.broadcast %cst_22 : f32 to vector<4x8x128xf32>
    %18 = arith.mulf %17, %16 : vector<4x8x128xf32>
    %19 = arith.addf %15, %18 : vector<4x8x128xf32>
    %c0_23 = arith.constant 0 : index
    %c3 = arith.constant 3 : index
    %c0_24 = arith.constant 0 : index
    %20 = vector.load %arg6[%c0_23, %c3, %c0_24] : memref<4x12x128xf32, #tpu.memory_space<vmem>>, vector<4x8x128xf32>
    %cst_25 = arith.constant 0.242105275 : f32
    %21 = vector.broadcast %cst_25 : f32 to vector<4x8x128xf32>
    %22 = arith.mulf %21, %20 : vector<4x8x128xf32>
    %23 = arith.addf %19, %22 : vector<4x8x128xf32>
    %c0_26 = arith.constant 0 : index
    %c4 = arith.constant 4 : index
    %c0_27 = arith.constant 0 : index
    %24 = vector.load %arg6[%c0_26, %c4, %c0_27] : memref<4x12x128xf32, #tpu.memory_space<vmem>>, vector<4x8x128xf32>
    %cst_28 = arith.constant 0.0584229901 : f32
    %25 = vector.broadcast %cst_28 : f32 to vector<4x8x128xf32>
    %26 = arith.mulf %25, %24 : vector<4x8x128xf32>
    %27 = arith.addf %23, %26 : vector<4x8x128xf32>
    %c2_29 = arith.constant 2 : index
    %c0_30 = arith.constant 0 : index
    %28 = vector.load %arg2[%c2_29, %c0_30] : memref<5x128xf32, #tpu.memory_space<vmem>>, vector<1x128xf32>
    %29 = vector.shape_cast %28 : vector<1x128xf32> to vector<128xf32>
    %30 = vector.shape_cast %29 : vector<128xf32> to vector<1x1x128xf32>
    %31 = vector.broadcast %30 : vector<1x1x128xf32> to vector<4x8x128xf32>
    %32 = arith.mulf %27, %31 : vector<4x8x128xf32>
    %c2_i32 = arith.constant 2 : i32
    %33 = tpu.dynamic_rotate %27 by %c2_i32 dim 2 : vector<4x8x128xf32>, i32 -> vector<4x8x128xf32>
    %c0_31 = arith.constant 0 : index
    %c0_32 = arith.constant 0 : index
    %34 = vector.load %arg2[%c0_31, %c0_32] : memref<5x128xf32, #tpu.memory_space<vmem>>, vector<1x128xf32>
    %35 = vector.shape_cast %34 : vector<1x128xf32> to vector<128xf32>
    %36 = vector.shape_cast %35 : vector<128xf32> to vector<1x1x128xf32>
    %37 = vector.broadcast %36 : vector<1x1x128xf32> to vector<4x8x128xf32>
    %38 = arith.mulf %33, %37 : vector<4x8x128xf32>
    %39 = arith.addf %32, %38 : vector<4x8x128xf32>
    %c1_i32 = arith.constant 1 : i32
    %40 = tpu.dynamic_rotate %27 by %c1_i32 dim 2 : vector<4x8x128xf32>, i32 -> vector<4x8x128xf32>
    %c1_33 = arith.constant 1 : index
    %c0_34 = arith.constant 0 : index
    %41 = vector.load %arg2[%c1_33, %c0_34] : memref<5x128xf32, #tpu.memory_space<vmem>>, vector<1x128xf32>
    %42 = vector.shape_cast %41 : vector<1x128xf32> to vector<128xf32>
    %43 = vector.shape_cast %42 : vector<128xf32> to vector<1x1x128xf32>
    %44 = vector.broadcast %43 : vector<1x1x128xf32> to vector<4x8x128xf32>
    %45 = arith.mulf %40, %44 : vector<4x8x128xf32>
    %46 = arith.addf %39, %45 : vector<4x8x128xf32>
    %c127_i32 = arith.constant 127 : i32
    %47 = tpu.dynamic_rotate %27 by %c127_i32 dim 2 : vector<4x8x128xf32>, i32 -> vector<4x8x128xf32>
    %c3_35 = arith.constant 3 : index
    %c0_36 = arith.constant 0 : index
    %48 = vector.load %arg2[%c3_35, %c0_36] : memref<5x128xf32, #tpu.memory_space<vmem>>, vector<1x128xf32>
    %49 = vector.shape_cast %48 : vector<1x128xf32> to vector<128xf32>
    %50 = vector.shape_cast %49 : vector<128xf32> to vector<1x1x128xf32>
    %51 = vector.broadcast %50 : vector<1x1x128xf32> to vector<4x8x128xf32>
    %52 = arith.mulf %47, %51 : vector<4x8x128xf32>
    %53 = arith.addf %46, %52 : vector<4x8x128xf32>
    %c126_i32 = arith.constant 126 : i32
    %54 = tpu.dynamic_rotate %27 by %c126_i32 dim 2 : vector<4x8x128xf32>, i32 -> vector<4x8x128xf32>
    %c4_37 = arith.constant 4 : index
    %c0_38 = arith.constant 0 : index
    %55 = vector.load %arg2[%c4_37, %c0_38] : memref<5x128xf32, #tpu.memory_space<vmem>>, vector<1x128xf32>
    %56 = vector.shape_cast %55 : vector<1x128xf32> to vector<128xf32>
    %57 = vector.shape_cast %56 : vector<128xf32> to vector<1x1x128xf32>
    %58 = vector.broadcast %57 : vector<1x1x128xf32> to vector<4x8x128xf32>
    %59 = arith.mulf %54, %58 : vector<4x8x128xf32>
    %60 = arith.addf %53, %59 : vector<4x8x128xf32>
    %c0_39 = arith.constant 0 : index
    %c0_40 = arith.constant 0 : index
    %c0_41 = arith.constant 0 : index
    %61 = vector.load %arg5[%c0_39, %c0_40, %c0_41] : memref<4x8x128xf32, #tpu.memory_space<vmem>>, vector<4x8x128xf32>
    tpu.vector_store %arg5[%c0_39, %c0_40, %c0_41], %60 {strides = array<i32>} : memref<4x8x128xf32, #tpu.memory_space<vmem>>, vector<4x8x128xf32>,
    return
  }
  func.func @transform_0(%arg0: i32, %arg1: i32) -> (i32, i32) {
    %c0_i32 = arith.constant 0 : i32
    %c0_i32_0 = arith.constant 0 : i32
    %c0_i32_1 = arith.constant 0 : i32
    return %c0_i32, %c0_i32_0 : i32, i32
  }
  func.func @transform_1(%arg0: i32, %arg1: i32) -> (i32, i32, i32) {
    %c0_i32 = arith.constant 0 : i32
    %c0_i32_0 = arith.constant 0 : i32
    return %arg0, %arg1, %c0_i32 : i32, i32, i32
  }
  func.func @transform_2(%arg0: i32, %arg1: i32) -> (i32, i32, i32, i32) {
    %c0_i32 = arith.constant 0 : i32
    %c0_i32_0 = arith.constant 0 : i32
    %c0_i32_1 = arith.constant 0 : i32
    return %arg0, %arg1, %c0_i32, %c0_i32_0 : i32, i32, i32, i32
  }
  func.func @transform_3(%arg0: i32, %arg1: i32) -> (i32, i32, i32) {
    %c0_i32 = arith.constant 0 : i32
    %c0_i32_0 = arith.constant 0 : i32
    return %arg0, %arg1, %c0_i32 : i32, i32, i32
  }
}

</mosaic_0001>

<llo_original>
// kernel: fwd.1
$region0: #{fwd.1}
  #allocation0 [shape = 'u32[]', space=smem, size = 0x4, offset = 0x4, fixed_abs, tag = 'smem constant byte address 0x4 - core index']
  #allocation1 [shape = 'u32[144,128]{1,0:T(1,128)}', space=vmem, size = 0x12000, scoped, tag = 'internal scratch']
  #allocation2 [shape = 'f32[4,12,128]{2,1,0:T(8,128)}', space=vmem, size = 0x8000, scoped, tag = 'scratch operand']
  %s0 = inlined_call_operand.vmem [shape: f32[5,128], index: 0, kind: input, shape index: {}]
  %s1 = inlined_call_operand.vmem [shape: f32[8,16,128], index: 1, kind: input, shape index: {}]
  %s2 = inlined_call_operand.vmem [shape: f32[8,2,4,128], index: 2, kind: input, shape index: {}]
  %s3 = inlined_call_operand.hbm [shape: f32[8,16,128], index: 3, kind: output, shape index: {}]
  %s4 = sld [smem:[#allocation0]]
  $region124: #{fwd.1} parent=0
    _
  %s6 = ssub.s32 1, %s4
  %s7 = scalar_select 0, %s6, %s4
  $region1: #{fwd.1} parent=0
    #allocation3 [shape = 'u8[32768]{0}', space=vmem, size = 0x8000, scoped, tag = 'input window, operand 1']
    #allocation4 [shape = 'u8[16384]{0}', space=vmem, size = 0x4000, scoped, tag = 'input window, operand 2']
    #allocation5 [shape = 'u8[32768]{0}', space=vmem, size = 0x8000, scoped, tag = 'output window, operand 0']
    #allocation6 [shape = 's32[2]{0}', space=sflag, size = 0x8, scoped, tag = 'scoped memory for fwd.1']
    %8 = vsyncpa [#allocation6], 0
    %s9 = scalar_lea.sflag [#allocation6], 1
    %10 = vsyncpa %s9, 0
    loop: start=0, step=1, limit=6
    $region2: #{fwd.1} parent=1 // loop_pre_header
      _
    $region3: #{fwd.1} parent=1 // loop_header
      %s12 = sphi 0, %s16
      %p13 = scmp.ge.s32.totalorder %s12, 6
      %s19 = sphi 0, %s31
      %s20 = sphi 0, %s27
      %s21 = sphi 0, %s19
      %s22 = sphi 0, %s20
      %s23 = sphi 0, %s21
      %s24 = sphi 0, %s22
      %s32 = sphi 0, %s32
      %s34 = sphi 0, %s32
      %s35 = sphi 0, %s34
      %s49 = sphi 0, %s35
      %s57 = sphi 0, %s59
      %s60 = sphi 0, %s57
      %s61 = sphi 0, %s60
      %s77 = sphi 0, %s61
      %s85 = sphi 0, %s87
      %s88 = sphi 0, %s85
      %s89 = sphi 0, %s88
      %s105 = sphi 0, %s89
      %s113 = sphi 0, %s115
      %s116 = sphi 0, %s113
      %s117 = sphi 0, %s116
      %s133 = sphi 0, %s117
    $region4: #{fwd.1} parent=1 // loop_header_branch
      %15 = sbr.rel (%p13) target = $region8
    $region5: #{fwd.1} parent=1 // loop_body
      %s17 = ssub.s32 %s12, 1
      %s18 = ssub.s32 %s12, 2
      %s25 = sadd.s32 1, %s20
      %p26 = scmp.ge.s32.totalorder %s25, 2
      %s27 = scalar_select %p26, 0, %s25
      %s28 = sadd.s32 1, %s19
      %s29 = scalar_select %p26, %s28, %s19
      %p30 = scmp.ge.s32.totalorder %s29, 2
      %s31 = scalar_select %p30, 0, %s29
      %s33 = sadd.s32 %s32, 1
      %p36 = scmp.eq.s32.totalorder %s12, 3
      %p37 = scmp.ne.s32.totalorder %s32, %s34
      %p38 = scmp.eq.s32.totalorder %s12, 0
      %p39 = por %p37, %p38
      %p40 = scmp.ne.s32.totalorder %s32, %s34
      %p41 = scmp.eq.s32.totalorder %s17, 3
      %p42 = por %p40, %p41
      %p43 = scmp.ne.s32.totalorder %s34, %s35
      %p44 = scmp.eq.s32.totalorder %s17, 0
      %p45 = por %p43, %p44
      %p46 = scmp.ne.s32.totalorder %s34, %s35
      %p47 = scmp.eq.s32.totalorder %s18, 3
      %p48 = por %p46, %p47
      %p50 = scmp.ne.s32.totalorder %s35, %s49
      %p51 = scmp.eq.s32.totalorder %s18, 0
      %p52 = por %p50, %p51
      %s53 = ssub.s32 %s19, %s31
      %s54 = ssub.s32 %s20, %s27
      %s55 = sor.u32 %s53, %s54
      %p56 = scmp.eq.s32.totalorder %s55, 0
      %s58 = sadd.s32 %s57, 1
      %s59 = scalar_select %p56, %s57, %s58
      %p62 = pneg %p56
      %p63 = scmp.eq.s32.totalorder %s12, 3
      %p64 = por %p62, %p63
      %p65 = scmp.ne.s32.totalorder %s57, %s60
      %p66 = scmp.eq.s32.totalorder %s12, 0
      %p67 = por %p65, %p66
      %p68 = scmp.ne.s32.totalorder %s57, %s60
      %p69 = scmp.eq.s32.totalorder %s17, 3
      %p70 = por %p68, %p69
      %p71 = scmp.ne.s32.totalorder %s60, %s61
      %p72 = scmp.eq.s32.totalorder %s17, 0
      %p73 = por %p71, %p72
      %p74 = scmp.ne.s32.totalorder %s60, %s61
      %p75 = scmp.eq.s32.totalorder %s18, 3
      %p76 = por %p74, %p75
      %p78 = scmp.ne.s32.totalorder %s61, %s77
      %p79 = scmp.eq.s32.totalorder %s18, 0
      %p80 = por %p78, %p79
      %s81 = ssub.s32 %s19, %s31
      %s82 = ssub.s32 %s20, %s27
      %s83 = sor.u32 %s81, %s82
      %p84 = scmp.eq.s32.totalorder %s83, 0
      %s86 = sadd.s32 %s85, 1
      %s87 = scalar_select %p84, %s85, %s86
      %p90 = pneg %p84
      %p91 = scmp.eq.s32.totalorder %s12, 3
      %p92 = por %p90, %p91
      %p93 = scmp.ne.s32.totalorder %s85, %s88
      %p94 = scmp.eq.s32.totalorder %s12, 0
      %p95 = por %p93, %p94
      %p96 = scmp.ne.s32.totalorder %s85, %s88
      %p97 = scmp.eq.s32.totalorder %s17, 3
      %p98 = por %p96, %p97
      %p99 = scmp.ne.s32.totalorder %s88, %s89
      %p100 = scmp.eq.s32.totalorder %s17, 0
      %p101 = por %p99, %p100
      %p102 = scmp.ne.s32.totalorder %s88, %s89
      %p103 = scmp.eq.s32.totalorder %s18, 3
      %p104 = por %p102, %p103
      %p106 = scmp.ne.s32.totalorder %s89, %s105
      %p107 = scmp.eq.s32.totalorder %s18, 0
      %p108 = por %p106, %p107
      %s109 = ssub.s32 %s19, %s31
      %s110 = ssub.s32 %s20, %s27
      %s111 = sor.u32 %s109, %s110
      %p112 = scmp.eq.s32.totalorder %s111, 0
      %s114 = sadd.s32 %s113, 1
      %s115 = scalar_select %p112, %s113, %s114
      %p118 = pneg %p112
      %p119 = scmp.eq.s32.totalorder %s12, 3
      %p120 = por %p118, %p119
      %p121 = scmp.ne.s32.totalorder %s113, %s116
      %p122 = scmp.eq.s32.totalorder %s12, 0
      %p123 = por %p121, %p122
      %p124 = scmp.ne.s32.totalorder %s113, %s116
      %p125 = scmp.eq.s32.totalorder %s17, 3
      %p126 = por %p124, %p125
      %p127 = scmp.ne.s32.totalorder %s116, %s117
      %p128 = scmp.eq.s32.totalorder %s17, 0
      %p129 = por %p127, %p128
      %p130 = scmp.ne.s32.totalorder %s116, %s117
      %p131 = scmp.eq.s32.totalorder %s18, 3
      %p132 = por %p130, %p131
      %p134 = scmp.ne.s32.totalorder %s117, %s133
      %p135 = scmp.eq.s32.totalorder %s18, 0
      %p136 = por %p134, %p135
      %p137 = scmp.le.s32.totalorder 1, %s12
      %p138 = scmp.lt.s32.totalorder %s12, 5
      %p139 = pnand %p137, %p138
      %p140 = pneg %p139
      // Predicated region
      $region9: #{fwd.1} parent=5 // pred_check
        _
      $region10: #{fwd.1} parent=5 // pred_check_branch
        %142 = sbr.rel (%p139) target = $region12
      $region11: #{fwd.1} parent=5 // pred_region
        %s143 = ssub.s32 %s12, 1
        // Predicated region
        $region13: #{fwd.1} parent=11 // pred_check
          %p144 = pneg %p45
        $region14: #{fwd.1} parent=11 // pred_check_branch
          %146 = sbr.rel (%p144) target = $region16
        $region15: #{fwd.1} parent=11 // pred_region
          _
        $region16: #{fwd.1} parent=11 // pred_fallthru
          _
      $region12: #{fwd.1} parent=5 // pred_fallthru
        _
      %p147 = scmp.lt.s32.totalorder %s12, 4
      // Predicated region
      $region17: #{fwd.1} parent=5 // pred_check
        %p148 = pneg %p147
      $region18: #{fwd.1} parent=5 // pred_check_branch
        %150 = sbr.rel (%p148) target = $region20
      $region19: #{fwd.1} parent=5 // pred_region
        // Predicated region
        $region21: #{fwd.1} parent=19 // pred_check
          %p151 = pneg %p67
        $region22: #{fwd.1} parent=19 // pred_check_branch
          %153 = sbr.rel (%p151) target = $region24
        $region23: #{fwd.1} parent=19 // pred_region
          %s154 = sand.u32 %s57, 1
          %s155 = sand.u32 %s57, 1
          %s156 = smul.addr %s155, 32
          %s157 = scalar_lea.vmem [#allocation3], %s156
          %s158 = smul.u32 4, %s19
          %s159 = smul.addr %s158, 2
          %s160 = sadd.s32 %s20, %s159
          %s161 = smul.addr %s160, 8
          %s162 = scalar_lea.vmem %s1, %s161
          // Predicated region
          $region25: #{fwd.1} parent=23 // pred_check
            _
          $region26: #{fwd.1} parent=23 // pred_check_branch
            %164 = sbr.rel (0) target = $region28
          $region27: #{fwd.1} parent=23 // pred_region
            // Predicated region
            $region29: #{fwd.1} parent=27 // pred_check
              _
            $region30: #{fwd.1} parent=27 // pred_check_branch
              %166 = sbr.rel (0) target = $region32
            $region31: #{fwd.1} parent=27 // pred_region
              // Predicated region
              $region44: #{fwd.1} parent=31 // pred_check
                _
              $region45: #{fwd.1} parent=31 // pred_check_branch
                %187 = sbr.rel (0) target = $region47
              $region46: #{fwd.1} parent=31 // pred_region
                loop: start=0, step=1, limit=1
                $region48: #{fwd.1} parent=46 // loop_pre_header
                  _
                $region49: #{fwd.1} parent=46 // loop_header
                  %s189 = sphi 0, %s193
                  %p190 = scmp.ge.s32.totalorder %s189, 1
                  %s194 = sphi %s162, %s162
                  %s195 = sphi %s157, %s157
                $region50: #{fwd.1} parent=46 // loop_header_branch
                  %192 = sbr.rel (%p190) target = $region54
                $region51: #{fwd.1} parent=46 // loop_body
                  %v196 = vld [vmem:[%s194] sm:$0xff]
                  %197 = vst [vmem:[%s195] sm:$0xff] %v196
                  %v198 = vld [vmem:[%s194 + $0x10] sm:$0xff]
                  %199 = vst [vmem:[%s195 + $0x8] sm:$0xff] %v198
                  %v200 = vld [vmem:[%s194 + $0x20] sm:$0xff]
                  %201 = vst [vmem:[%s195 + $0x10] sm:$0xff] %v200
                  %v202 = vld [vmem:[%s194 + $0x30] sm:$0xff]
                  %203 = vst [vmem:[%s195 + $0x18] sm:$0xff] %v202
                $region52: #{fwd.1} parent=46 // loop_footer
                  %s193 = sadd.s32 1, %s189
                $region53: #{fwd.1} parent=46 // loop_footer_branch
                  %188 = sbr.rel target = $region49
                $region54: #{fwd.1} parent=46 // loop_exit
                  _
              $region47: #{fwd.1} parent=31 // pred_fallthru
                _
              // Predicated region
              $region55: #{fwd.1} parent=31 // pred_check
                _
              $region56: #{fwd.1} parent=31 // pred_check_branch
                %205 = sbr.rel target = $region58
              $region57: #{fwd.1} parent=31 // pred_region
                _
              $region58: #{fwd.1} parent=31 // pred_fallthru
                _
            $region32: #{fwd.1} parent=27 // pred_fallthru
              _
            // Predicated region
            $region33: #{fwd.1} parent=27 // pred_check
              _
            $region34: #{fwd.1} parent=27 // pred_check_branch
              %168 = sbr.rel target = $region36
            $region35: #{fwd.1} parent=27 // pred_region
              loop: start=0, step=1, limit=1
              $region37: #{fwd.1} parent=35 // loop_pre_header
                _
              $region38: #{fwd.1} parent=35 // loop_header
                %s171 = sphi 0, %s175
                %p172 = scmp.ge.s32.totalorder %s171, 1
                %s176 = sphi %s162, %s162
                %s177 = sphi %s157, %s157
              $region39: #{fwd.1} parent=35 // loop_header_branch
                %174 = sbr.rel (%p172) target = $region43
              $region40: #{fwd.1} parent=35 // loop_body
                %v178 = vld [vmem:[%s176] sm:$0xff]
                %179 = vst [vmem:[%s177] sm:$0xff] %v178
                %v180 = vld [vmem:[%s176 + $0x10] sm:$0xff]
                %181 = vst [vmem:[%s177 + $0x8] sm:$0xff] %v180
                %v182 = vld [vmem:[%s176 + $0x20] sm:$0xff]
                %183 = vst [vmem:[%s177 + $0x10] sm:$0xff] %v182
                %v184 = vld [vmem:[%s176 + $0x30] sm:$0xff]
                %185 = vst [vmem:[%s177 + $0x18] sm:$0xff] %v184
              $region41: #{fwd.1} parent=35 // loop_footer
                %s175 = sadd.s32 1, %s171
              $region42: #{fwd.1} parent=35 // loop_footer_branch
                %170 = sbr.rel target = $region38
              $region43: #{fwd.1} parent=35 // loop_exit
                _
            $region36: #{fwd.1} parent=27 // pred_fallthru
              _
          $region28: #{fwd.1} parent=23 // pred_fallthru
            _
          %206 = vnop
        $region24: #{fwd.1} parent=19 // pred_fallthru
          _
        // Predicated region
        $region59: #{fwd.1} parent=19 // pred_check
          %p207 = pneg %p95
        $region60: #{fwd.1} parent=19 // pred_check_branch
          %209 = sbr.rel (%p207) target = $region62
        $region61: #{fwd.1} parent=19 // pred_region
          %s210 = sand.u32 %s85, 1
          %s211 = sand.u32 %s85, 1
          %s212 = smul.addr %s211, 16
          %s213 = scalar_lea.vmem [#allocation4], %s212
          %s214 = smul.u32 4, %s19
          %s215 = smul.addr %s214, 2
          %s216 = sadd.s32 %s20, %s215
          %s217 = smul.addr %s216, 4
          %s218 = scalar_lea.vmem %s2, %s217
          // Predicated region
          $region63: #{fwd.1} parent=61 // pred_check
            _
          $region64: #{fwd.1} parent=61 // pred_check_branch
            %220 = sbr.rel (0) target = $region66
          $region65: #{fwd.1} parent=61 // pred_region
            // Predicated region
            $region67: #{fwd.1} parent=65 // pred_check
              _
            $region68: #{fwd.1} parent=65 // pred_check_branch
              %222 = sbr.rel target = $region70
            $region69: #{fwd.1} parent=65 // pred_region
              // Predicated region
              $region82: #{fwd.1} parent=69 // pred_check
                _
              $region83: #{fwd.1} parent=69 // pred_check_branch
                %243 = sbr.rel (0) target = $region85
              $region84: #{fwd.1} parent=69 // pred_region
                loop: start=0, step=1, limit=1
                $region86: #{fwd.1} parent=84 // loop_pre_header
                  _
                $region87: #{fwd.1} parent=84 // loop_header
                  %s245 = sphi 0, %s249
                  %p246 = scmp.ge.s32.totalorder %s245, 1
                  %s250 = sphi %s218, %s218
                  %s251 = sphi %s213, %s213
                $region88: #{fwd.1} parent=84 // loop_header_branch
                  %248 = sbr.rel (%p246) target = $region92
                $region89: #{fwd.1} parent=84 // loop_body
                  _
                $region90: #{fwd.1} parent=84 // loop_footer
                  %s249 = sadd.s32 1, %s245
                $region91: #{fwd.1} parent=84 // loop_footer_branch
                  %244 = sbr.rel target = $region87
                $region92: #{fwd.1} parent=84 // loop_exit
                  _
                loop: start=0, step=1, limit=1
                $region93: #{fwd.1} parent=84 // loop_pre_header
                  _
                $region94: #{fwd.1} parent=84 // loop_header
                  %s254 = sphi 0, %s258
                  %p255 = scmp.ge.s32.totalorder %s254, 1
                  %s259 = sphi %s218, %s218
                  %s260 = sphi %s213, %s213
                $region95: #{fwd.1} parent=84 // loop_header_branch
                  %257 = sbr.rel (%p255) target = $region99
                $region96: #{fwd.1} parent=84 // loop_body
                  %v261 = vld [vmem:[%s259] sm:$0xf]
                  %262 = vst [vmem:[%s260] sm:$0xf] %v261
                  %v263 = vld [vmem:[%s259 + $0x8] sm:$0xf]
                  %264 = vst [vmem:[%s260 + $0x4] sm:$0xf] %v263
                  %v265 = vld [vmem:[%s259 + $0x10] sm:$0xf]
                  %266 = vst [vmem:[%s260 + $0x8] sm:$0xf] %v265
                  %v267 = vld [vmem:[%s259 + $0x18] sm:$0xf]
                  %268 = vst [vmem:[%s260 + $0xc] sm:$0xf] %v267
                $region97: #{fwd.1} parent=84 // loop_footer
                  %s258 = sadd.s32 1, %s254
                $region98: #{fwd.1} parent=84 // loop_footer_branch
                  %253 = sbr.rel target = $region94
                $region99: #{fwd.1} parent=84 // loop_exit
                  _
              $region85: #{fwd.1} parent=69 // pred_fallthru
                _
            $region70: #{fwd.1} parent=65 // pred_fallthru
              _
            // Predicated region
            $region71: #{fwd.1} parent=65 // pred_check
              _
            $region72: #{fwd.1} parent=65 // pred_check_branch
              %224 = sbr.rel (0) target = $region74
            $region73: #{fwd.1} parent=65 // pred_region
              loop: start=0, step=1, limit=1
              $region75: #{fwd.1} parent=73 // loop_pre_header
                _
              $region76: #{fwd.1} parent=73 // loop_header
                %s227 = sphi 0, %s231
                %p228 = scmp.ge.s32.totalorder %s227, 1
                %s232 = sphi %s218, %s218
                %s233 = sphi %s213, %s213
              $region77: #{fwd.1} parent=73 // loop_header_branch
                %230 = sbr.rel (%p228) target = $region81
              $region78: #{fwd.1} parent=73 // loop_body
                %v234 = vld [vmem:[%s232] sm:$0xf]
                %235 = vst [vmem:[%s233] sm:$0xf] %v234
                %v236 = vld [vmem:[%s232 + $0x8] sm:$0xf]
                %237 = vst [vmem:[%s233 + $0x4] sm:$0xf] %v236
                %v238 = vld [vmem:[%s232 + $0x10] sm:$0xf]
                %239 = vst [vmem:[%s233 + $0x8] sm:$0xf] %v238
                %v240 = vld [vmem:[%s232 + $0x18] sm:$0xf]
                %241 = vst [vmem:[%s233 + $0xc] sm:$0xf] %v240
              $region79: #{fwd.1} parent=73 // loop_footer
                %s231 = sadd.s32 1, %s227
              $region80: #{fwd.1} parent=73 // loop_footer_branch
                %226 = sbr.rel target = $region76
              $region81: #{fwd.1} parent=73 // loop_exit
                _
            $region74: #{fwd.1} parent=65 // pred_fallthru
              _
          $region66: #{fwd.1} parent=61 // pred_fallthru
            _
          %269 = vnop
        $region62: #{fwd.1} parent=19 // pred_fallthru
          _
      $region20: #{fwd.1} parent=5 // pred_fallthru
        _
      %p270 = scmp.le.s32.totalorder 1, %s12
      %p271 = scmp.lt.s32.totalorder %s12, 5
      %p272 = pnand %p270, %p271
      %p273 = pneg %p272
      // Predicated region
      $region100: #{fwd.1} parent=5 // pred_check
        _
      $region101: #{fwd.1} parent=5 // pred_check_branch
        %275 = sbr.rel (%p272) target = $region103
      $region102: #{fwd.1} parent=5 // pred_region
        %s276 = ssub.s32 %s12, 1
        %s277 = sand.u32 %s60, 1
        %s278 = sand.u32 %s60, 1
        %s279 = smul.addr %s278, 32
        %s280 = scalar_lea.vmem [#allocation3], %s279
        // Predicated region
        $region104: #{fwd.1} parent=102 // pred_check
          %p281 = pneg %p73
        $region105: #{fwd.1} parent=102 // pred_check_branch
          %283 = sbr.rel (%p281) target = $region107
        $region106: #{fwd.1} parent=102 // pred_region
          _
        $region107: #{fwd.1} parent=102 // pred_fallthru
          _
        %s284 = sand.u32 %s88, 1
        %s285 = sand.u32 %s88, 1
        %s286 = smul.addr %s285, 16
        %s287 = scalar_lea.vmem [#allocation4], %s286
        // Predicated region
        $region108: #{fwd.1} parent=102 // pred_check
          %p288 = pneg %p101
        $region109: #{fwd.1} parent=102 // pred_check_branch
          %290 = sbr.rel (%p288) target = $region111
        $region110: #{fwd.1} parent=102 // pred_region
          _
        $region111: #{fwd.1} parent=102 // pred_fallthru
          _
        %p291 = pneg %p45
        %p292 = pneg %p42
        %s293 = sand.u32 %s60, 1
        %s294 = sand.u32 %s60, 1
        %s295 = smul.addr %s294, 32
        %s296 = scalar_lea.vmem [#allocation3], %s295
        %p297 = pneg %p73
        %p298 = pneg %p70
        %s299 = sand.u32 %s88, 1
        %s300 = sand.u32 %s88, 1
        %s301 = smul.addr %s300, 16
        %s302 = scalar_lea.vmem [#allocation4], %s301
        %p303 = pneg %p101
        %p304 = pneg %p98
        %p305 = pneg %p129
        %p306 = pneg %p126
        %s307 = sand.u32 %s116, 1
        %s308 = scalar_lea.sflag [#allocation6], %s307
        %s309 = sand.u32 %s116, 1
        %s310 = smul.addr %s309, 32
        %s311 = scalar_lea.vmem [#allocation5], %s310
        %s312 = smul.u32 4, %s21
        %s313 = smul.u32 4, %s21
        %s314 = smul.u32 4, %s21
        %v315 = vld [vmem:[%s280] sm:$0xff]
        %v316 = vld [vmem:[%s280 + $0x8] sm:$0xff]
        %v317 = vld [vmem:[%s280 + $0x10] sm:$0xff]
        %v318 = vld [vmem:[%s280 + $0x18] sm:$0xff]
        %319 = vst [vmem:[#allocation2 + $0x2] sm:$0xff] %v315
        %320 = vst [vmem:[#allocation2 + $0x12] sm:$0xff] %v316
        %321 = vst [vmem:[#allocation2 + $0x22] sm:$0xff] %v317
        %322 = vst [vmem:[#allocation2 + $0x32] sm:$0xff] %v318
        %v323 = vld [vmem:[%s287] sm:$0xf]
        %v324 = vld [vmem:[%s287 + $0x4] sm:$0xf]
        %v325 = vld [vmem:[%s287 + $0x8] sm:$0xf]
        %v326 = vld [vmem:[%s287 + $0xc] sm:$0xf]
        %327 = vst [vmem:[#allocation2] sm:$0x3] %v323
        %328 = vst [vmem:[#allocation2 + $0x10] sm:$0x3] %v324
        %329 = vst [vmem:[#allocation2 + $0x20] sm:$0x3] %v325
        %330 = vst [vmem:[#allocation2 + $0x30] sm:$0x3] %v326
        %331 = vst [vmem:[#allocation2 + $0x8] sm:$0xc] %v323
        %332 = vst [vmem:[#allocation2 + $0x18] sm:$0xc] %v324
        %333 = vst [vmem:[#allocation2 + $0x28] sm:$0xc] %v325
        %334 = vst [vmem:[#allocation2 + $0x38] sm:$0xc] %v326
        %v335 = vld [vmem:[#allocation2] sm:$0xff]
        %v336 = vld [vmem:[#allocation2 + $0x10] sm:$0xff]
        %v337 = vld [vmem:[#allocation2 + $0x20] sm:$0xff]
        %v338 = vld [vmem:[#allocation2 + $0x30] sm:$0xff]
        %v339 = vmul.f32 %v335, 0.05842299
        %v340 = vmul.f32 %v336, 0.05842299
        %v341 = vmul.f32 %v337, 0.05842299
        %v342 = vmul.f32 %v338, 0.05842299
        %v343 = vld [vmem:[#allocation2 + $0x1] sm:$0xff]
        %v344 = vld [vmem:[#allocation2 + $0x11] sm:$0xff]
        %v345 = vld [vmem:[#allocation2 + $0x21] sm:$0xff]
        %v346 = vld [vmem:[#allocation2 + $0x31] sm:$0xff]
        %v347 = vmul.f32 %v343, 0.24210528
        %v348 = vmul.f32 %v344, 0.24210528
        %v349 = vmul.f32 %v345, 0.24210528
        %v350 = vmul.f32 %v346, 0.24210528
        %v351 = vadd.f32 %v339, %v347
        %v352 = vadd.f32 %v340, %v348
        %v353 = vadd.f32 %v341, %v349
        %v354 = vadd.f32 %v342, %v350
        %v355 = vld [vmem:[#allocation2 + $0x2] sm:$0xff]
        %v356 = vld [vmem:[#allocation2 + $0x12] sm:$0xff]
        %v357 = vld [vmem:[#allocation2 + $0x22] sm:$0xff]
        %v358 = vld [vmem:[#allocation2 + $0x32] sm:$0xff]
        %v359 = vmul.f32 %v355, 0.39894348
        %v360 = vmul.f32 %v356, 0.39894348
        %v361 = vmul.f32 %v357, 0.39894348
        %v362 = vmul.f32 %v358, 0.39894348
        %v363 = vadd.f32 %v351, %v359
        %v364 = vadd.f32 %v352, %v360
        %v365 = vadd.f32 %v353, %v361
        %v366 = vadd.f32 %v354, %v362
        %v367 = vld [vmem:[#allocation2 + $0x3] sm:$0xff]
        %v368 = vld [vmem:[#allocation2 + $0x13] sm:$0xff]
        %v369 = vld [vmem:[#allocation2 + $0x23] sm:$0xff]
        %v370 = vld [vmem:[#allocation2 + $0x33] sm:$0xff]
        %v371 = vmul.f32 %v367, 0.24210528
        %v372 = vmul.f32 %v368, 0.24210528
        %v373 = vmul.f32 %v369, 0.24210528
        %v374 = vmul.f32 %v370, 0.24210528
        %v375 = vadd.f32 %v363, %v371
        %v376 = vadd.f32 %v364, %v372
        %v377 = vadd.f32 %v365, %v373
        %v378 = vadd.f32 %v366, %v374
        %v379 = vld [vmem:[#allocation2 + $0x4] sm:$0xff]
        %v380 = vld [vmem:[#allocation2 + $0x14] sm:$0xff]
        %v381 = vld [vmem:[#allocation2 + $0x24] sm:$0xff]
        %v382 = vld [vmem:[#allocation2 + $0x34] sm:$0xff]
        %v383 = vmul.f32 %v379, 0.05842299
        %v384 = vmul.f32 %v380, 0.05842299
        %v385 = vmul.f32 %v381, 0.05842299
        %v386 = vmul.f32 %v382, 0.05842299
        %v387 = vadd.f32 %v375, %v383
        %v388 = vadd.f32 %v376, %v384
        %v389 = vadd.f32 %v377, %v385
        %v390 = vadd.f32 %v378, %v386
        %v391 = vld [vmem:[%s0 + $0x2] sm:$0x1]
        %v392 = vlaneseq
        %v393 = vshrl.u32 %v392, 7
        %v394 = vsub.s32 0, %v393
        %v395 = vrot.slane %v391, %v394
        %v396 = vmul.f32 %v387, %v395
        %v397 = vmul.f32 %v388, %v395
        %v398 = vmul.f32 %v389, %v395
        %v399 = vmul.f32 %v390, %v395
        %400 = vrot.lane.b32.xlu0 %v387, 2
        %v401 = vpop.permute.xlu0 %400
        %402 = vrot.lane.b32.xlu0 %v388, 2
        %v403 = vpop.permute.xlu0 %402
        %404 = vrot.lane.b32.xlu0 %v389, 2
        %v405 = vpop.permute.xlu0 %404
        %406 = vrot.lane.b32.xlu0 %v390, 2
        %v407 = vpop.permute.xlu0 %406
        %v408 = vld [vmem:[%s0] sm:$0x1]
        %v409 = vlaneseq
        %v410 = vshrl.u32 %v409, 7
        %v411 = vsub.s32 0, %v410
        %v412 = vrot.slane %v408, %v411
        %v413 = vmul.f32 %v401, %v412
        %v414 = vmul.f32 %v403, %v412
        %v415 = vmul.f32 %v405, %v412
        %v416 = vmul.f32 %v407, %v412
        %v417 = vadd.f32 %v396, %v413
        %v418 = vadd.f32 %v397, %v414
        %v419 = vadd.f32 %v398, %v415
        %v420 = vadd.f32 %v399, %v416
        %421 = vrot.lane.b32.xlu0 %v387, 1
        %v422 = vpop.permute.xlu0 %421
        %423 = vrot.lane.b32.xlu0 %v388, 1
        %v424 = vpop.permute.xlu0 %423
        %425 = vrot.lane.b32.xlu0 %v389, 1
        %v426 = vpop.permute.xlu0 %425
        %427 = vrot.lane.b32.xlu0 %v390, 1
        %v428 = vpop.permute.xlu0 %427
        %v429 = vld [vmem:[%s0 + $0x1] sm:$0x1]
        %v430 = vlaneseq
        %v431 = vshrl.u32 %v430, 7
        %v432 = vsub.s32 0, %v431
        %v433 = vrot.slane %v429, %v432
        %v434 = vmul.f32 %v422, %v433
        %v435 = vmul.f32 %v424, %v433
        %v436 = vmul.f32 %v426, %v433
        %v437 = vmul.f32 %v428, %v433
        %v438 = vadd.f32 %v417, %v434
        %v439 = vadd.f32 %v418, %v435
        %v440 = vadd.f32 %v419, %v436
        %v441 = vadd.f32 %v420, %v437
        %442 = vrot.lane.b32.xlu0 %v387, 127
        %v443 = vpop.permute.xlu0 %442
        %444 = vrot.lane.b32.xlu0 %v388, 127
        %v445 = vpop.permute.xlu0 %444
        %446 = vrot.lane.b32.xlu0 %v389, 127
        %v447 = vpop.permute.xlu0 %446
        %448 = vrot.lane.b32.xlu0 %v390, 127
        %v449 = vpop.permute.xlu0 %448
        %v450 = vld [vmem:[%s0 + $0x3] sm:$0x1]
        %v451 = vlaneseq
        %v452 = vshrl.u32 %v451, 7
        %v453 = vsub.s32 0, %v452
        %v454 = vrot.slane %v450, %v453
        %v455 = vmul.f32 %v443, %v454
        %v456 = vmul.f32 %v445, %v454
        %v457 = vmul.f32 %v447, %v454
        %v458 = vmul.f32 %v449, %v454
        %v459 = vadd.f32 %v438, %v455
        %v460 = vadd.f32 %v439, %v456
        %v461 = vadd.f32 %v440, %v457
        %v462 = vadd.f32 %v441, %v458
        %463 = vrot.lane.b32.xlu0 %v387, 126
        %v464 = vpop.permute.xlu0 %463
        %465 = vrot.lane.b32.xlu0 %v388, 126
        %v466 = vpop.permute.xlu0 %465
        %467 = vrot.lane.b32.xlu0 %v389, 126
        %v468 = vpop.permute.xlu0 %467
        %469 = vrot.lane.b32.xlu0 %v390, 126
        %v470 = vpop.permute.xlu0 %469
        %v471 = vld [vmem:[%s0 + $0x4] sm:$0x1]
        %v472 = vlaneseq
        %v473 = vshrl.u32 %v472, 7
        %v474 = vsub.s32 0, %v473
        %v475 = vrot.slane %v471, %v474
        %v476 = vmul.f32 %v464, %v475
        %v477 = vmul.f32 %v466, %v475
        %v478 = vmul.f32 %v468, %v475
        %v479 = vmul.f32 %v470, %v475
        %v480 = vadd.f32 %v459, %v476
        %v481 = vadd.f32 %v460, %v477
        %v482 = vadd.f32 %v461, %v478
        %v483 = vadd.f32 %v462, %v479
        %484 = vst [vmem:[%s311] sm:$0xff] %v480
        %485 = vst [vmem:[%s311 + $0x8] sm:$0xff] %v481
        %486 = vst [vmem:[%s311 + $0x10] sm:$0xff] %v482
        %487 = vst [vmem:[%s311 + $0x18] sm:$0xff] %v483
        %s488 = sand.u32 %s116, 1
        %s489 = scalar_lea.sflag [#allocation6], %s488
        %s490 = sand.u32 %s116, 1
        %s491 = smul.addr %s490, 32
        %s492 = scalar_lea.vmem [#allocation5], %s491
        // Predicated region
        $region112: #{fwd.1} parent=102 // pred_check
          %p493 = pneg %p126
        $region113: #{fwd.1} parent=102 // pred_check_branch
          %495 = sbr.rel (%p493) target = $region115
        $region114: #{fwd.1} parent=102 // pred_region
          %s496 = smul.u32 4, %s21
          %s498 = ssub.s32 512, 512
          %499 = vsyncadd %s489, %s498
          %s500 = smul.addr %s496, 2
          %s501 = sadd.s32 %s22, %s500
          %s502 = smul.addr %s501, 128
          %s503 = scalar_lea.hbm %s3, %s502
          %s504 = sshll.u32 %s492, 4
          %s505 = int_to_ptr.vmem [resolvable:$true] %s504
          %510 = dma.vmem_to_hbm [thread:$0]  %s505, 512, %s503, %s489, 128, 256, 8
        $region115: #{fwd.1} parent=102 // pred_fallthru
          _
      $region103: #{fwd.1} parent=5 // pred_fallthru
        _
      %p511 = scmp.le.s32.totalorder 2, %s12
      // Predicated region
      $region116: #{fwd.1} parent=5 // pred_check
        %p512 = pneg %p511
      $region117: #{fwd.1} parent=5 // pred_check_branch
        %514 = sbr.rel (%p512) target = $region119
      $region118: #{fwd.1} parent=5 // pred_region
        %s515 = ssub.s32 %s12, 2
        // Predicated region
        $region120: #{fwd.1} parent=118 // pred_check
          %p516 = pneg %p132
        $region121: #{fwd.1} parent=118 // pred_check_branch
          %518 = sbr.rel (%p516) target = $region123
        $region122: #{fwd.1} parent=118 // pred_region
          %s519 = sand.u32 %s117, 1
          %s520 = scalar_lea.sflag [#allocation6], %s519
          %s521 = sand.u32 %s117, 1
          %s522 = smul.addr %s521, 32
          %s523 = scalar_lea.vmem [#allocation5], %s522
          %524 = dma.done %s520, 512
        $region123: #{fwd.1} parent=118 // pred_fallthru
          _
      $region119: #{fwd.1} parent=5 // pred_fallthru
        _
    $region6: #{fwd.1} parent=1 // loop_footer
      %s16 = sadd.s32 1, %s12
    $region7: #{fwd.1} parent=1 // loop_footer_branch
      %11 = sbr.rel target = $region3
    $region8: #{fwd.1} parent=1 // loop_exit
      _
    %525 = vsyncpa [#allocation6], 1
    %s526 = scalar_lea.sflag [#allocation6], 1
    %527 = vsyncpa %s526, 1

</llo_original>
